<compile_context>
chip_gen: v6e
topology: v6e:2x2x1
jax: 0.10.0
libtpu: 0.0.40
codegen_flags: <defaults>
</compile_context>

<pallas_src>
import jax
import jax.numpy as jnp
from jax.experimental import pallas as pl
from jax.experimental.pallas import tpu as pltpu


def _vmem_capacity_bytes():
    try:
        return int(pltpu.get_tpu_info().vmem_capacity_bytes)
    except Exception:
        return 64 * 1024 * 1024  # conservative fallback (v7x per-TC VMEM)


def _num_tensorcores():
    """Best-effort TensorCore count (2 on v7x, 1 on v5e/v6e). Defaults to 1."""
    try:
        info = pltpu.get_tpu_info()
        for attr in ("num_cores", "tensorcore_count", "num_tensorcores",
                     "core_count", "cores_per_chip"):
            v = getattr(info, attr, None)
            if isinstance(v, int) and v >= 1:
                return v
    except Exception:
        pass
    return 1


def _pick_tile_n(n, c, in_itemsize, vmem_limit_bytes):
    """Largest sample-tile (multiple of 8) whose real VMEM footprint fits.

    Footprint per tile ~= 2*TN*C*itemsize (double-buffered input DMA)
                        + 2*TN*C*4       (f32 working set during the sweep)
                        + small (TN,1) vectors,
    required to stay below ~half the scoped VMEM limit.
    """
    budget = vmem_limit_bytes // 2
    per_row = c * (2 * in_itemsize + 2 * 4) + 4 * 4
    tn = budget // max(1, per_row)
    n8 = ((n + 7) // 8) * 8
    tn = min(int(tn), n8)
    tn = max(8, tn - (tn % 8))
    return tn


def _make_kernel(gamma, n_true, tile_n, tiles_per_core, has_alpha):
    gamma = float(gamma)
    g_int = int(gamma)
    int_gamma = (float(g_int) == gamma) and (g_int >= 0)

    def kernel(*refs):
        if has_alpha:
            logits_ref, targets_ref, at_ref, out_ref = refs
        else:
            logits_ref, targets_ref, out_ref = refs
            at_ref = None

        p = pl.program_id(0)   # core / partial index        ("parallel")
        i = pl.program_id(1)   # sample-tile index per core  ("arbitrary")

        # Resident-output accumulator: zero at the first tile of this partial.
        @pl.when(i == 0)
        def _():
            out_ref[...] = jnp.zeros_like(out_ref)

        logits = logits_ref[...]                 # (TN, C) native dtype, no copy
        tgt = targets_ref[...]                   # (TN, 1) int32
        tn, c = logits.shape

        # target-class logit: fused select + cast + lane reduce -> (TN, 1) f32
        cls_idx = jax.lax.broadcasted_iota(jnp.int32, (tn, c), 1)
        logit_t = jnp.sum(
            jnp.where(cls_idx == tgt, logits, 0).astype(jnp.float32),
            axis=-1, keepdims=True)

        # numerically stable log-sum-exp; row max is exact in the input dtype,
        # exp/accumulate happen in f32.
        m = jnp.max(logits, axis=-1, keepdims=True)                 # (TN, 1)
        sumexp = jnp.sum(jnp.exp((logits - m).astype(jnp.float32)),
                         axis=-1, keepdims=True)                    # (TN, 1)
        lse = m.astype(jnp.float32) + jnp.log(sumexp)

        # Mask out-of-range rows BEFORE the remaining transcendentals so the
        # unpadded edge tile's garbage rows can never produce NaN/Inf.
        row0 = (p * tiles_per_core + i) * tile_n
        rows = jax.lax.broadcasted_iota(jnp.int32, (tn, 1), 0) + row0
        valid = rows < n_true
        ce = jnp.where(valid, lse - logit_t, 0.0)                   # (TN, 1)

        pt = jnp.exp(-ce)
        u = jnp.maximum(1.0 - pt, 0.0)   # clamp ULP-negative ce -> no NaN
        if int_gamma:
            if g_int == 0:
                w = jnp.ones_like(u)
            else:
                w = u                     # gamma=2 -> u*u, pure VPU multiplies
                for _ in range(g_int - 1):
                    w = w * u
        else:
            w = u ** gamma
        focal = w * ce                                              # (TN, 1)

        if has_alpha:
            focal = at_ref[...].astype(jnp.float32) * focal
        focal = jnp.where(valid, focal, 0.0)   # guards garbage alpha rows too

        out_ref[...] = out_ref[...] + jnp.sum(focal)

    return kernel


def focal_loss(logits, targets, gamma=2.0, alpha=None):
    """logits: (N, C) float (any dtype); targets: (N,) int; returns scalar f32."""
    n, c = logits.shape
    in_itemsize = jnp.dtype(logits.dtype).itemsize

    vmem_cap = _vmem_capacity_bytes()
    vmem_limit = max(16 << 20, min(vmem_cap - (8 << 20), 100 << 20))

    tn = _pick_tile_n(n, c, in_itemsize, vmem_limit)
    num_tiles = int(pl.cdiv(n, tn))

    num_cores = _num_tensorcores()
    p_parts = max(1, min(num_cores, num_tiles))
    tiles_per_core = int(pl.cdiv(num_tiles, p_parts))

    # Trace-time safety check: live bytes (double-buffered input + f32 temps)
    # must fit the scoped VMEM limit (v7x: 64 MiB/TC => ~56 MiB limit).
    live_bytes = tn * c * (2 * in_itemsize + 2 * 4) + 16 * tn
    assert live_bytes <= vmem_limit, (live_bytes, vmem_limit)

    tgt2d = targets.astype(jnp.int32).reshape(n, 1)

    last_blk = num_tiles - 1

    def blk_map(pp, ii, _t=tiles_per_core, _last=last_blk):
        # Clamp tiles that fall entirely past the end (only possible when the
        # per-core round-up overshoots); their rows are masked to zero.
        return (jnp.minimum(pp * _t + ii, _last), 0)

    has_alpha = alpha is not None
    args = [logits, tgt2d]
    in_specs = [
        pl.BlockSpec((tn, c), blk_map),
        pl.BlockSpec((tn, 1), blk_map),
    ]
    if has_alpha:
        # per-sample alpha gathered with XLA (cheap) and streamed as (N, 1)
        a_t = jnp.asarray(alpha, jnp.float32)[targets.astype(jnp.int32)]
        args.append(a_t.reshape(n, 1))
        in_specs.append(pl.BlockSpec((tn, 1), blk_map))

    kernel = _make_kernel(gamma, n, tn, tiles_per_core, has_alpha)

    partials = pl.pallas_call(
        kernel,
        out_shape=jax.ShapeDtypeStruct((p_parts, 1, 1), jnp.float32),
        grid=(p_parts, tiles_per_core),
        in_specs=in_specs,
        out_specs=pl.BlockSpec((1, 1, 1), lambda pp, ii: (pp, 0, 0)),
        compiler_params=pltpu.CompilerParams(
            dimension_semantics=("parallel", "arbitrary"),
            vmem_limit_bytes=vmem_limit),
    )(*args)

    # combine per-core partial sums and take the mean over the true N
    return jnp.sum(partials) / jnp.float32(n)


def _focal_loss_ref(logits, targets, gamma=2.0, alpha=None):
    logp = jax.nn.log_softmax(logits.astype(jnp.float32), axis=-1)
    ce = -jnp.take_along_axis(logp, targets[:, None], axis=-1)[:, 0]
    pt = jnp.exp(-ce)
    fl = (1.0 - pt) ** gamma * ce
    if alpha is not None:
        fl = jnp.asarray(alpha, jnp.float32)[targets] * fl
    return jnp.mean(fl)


if __name__ == "__main__":
    key = jax.random.PRNGKey(0)
    k1, k2, k3, k4 = jax.random.split(key, 4)

    # small shapes: 8 samples, 32 classes
    N, C = 8, 32
    logits = jax.random.normal(k1, (N, C), dtype=jnp.float32)
    targets = jax.random.randint(k2, (N,), 0, C, dtype=jnp.int32)

    # alpha=None path
    out = jax.block_until_ready(focal_loss(logits, targets, gamma=2.0, alpha=None))
    ref = _focal_loss_ref(logits, targets, gamma=2.0, alpha=None)
    assert jnp.allclose(out, ref, rtol=1e-5, atol=1e-5), (out, ref)

    # alpha path (per-class weights)
    alpha = jnp.linspace(0.5, 1.5, C, dtype=jnp.float32)
    out_a = jax.block_until_ready(focal_loss(logits, targets, gamma=2.0, alpha=alpha))
    ref_a = _focal_loss_ref(logits, targets, gamma=2.0, alpha=alpha)
    assert jnp.allclose(out_a, ref_a, rtol=1e-5, atol=1e-5), (out_a, ref_a)

    # non-divisible N exercises the unpadded edge-tile masking path
    N2 = 12
    logits2 = jax.random.normal(k3, (N2, C), dtype=jnp.float32)
    targets2 = jax.random.randint(k4, (N2,), 0, C, dtype=jnp.int32)
    out2 = jax.block_until_ready(focal_loss(logits2, targets2, gamma=2.0, alpha=alpha))
    ref2 = _focal_loss_ref(logits2, targets2, gamma=2.0, alpha=alpha)
    assert jnp.allclose(out2, ref2, rtol=1e-5, atol=1e-5), (out2, ref2)

    print("KERNEL_OK")
</pallas_src>

<mosaic_0001>
module attributes {stable_mosaic.version = 11 : i64} {
  func.func @kernel(%arg0: i32, %arg1: i32, %arg2: memref<8x32xf32, #tpu.memory_space<vmem>>, %arg3: memref<8x1xi32, #tpu.memory_space<vmem>>, %arg4: memref<1x1x1xf32, #tpu.memory_space<vmem>>) attributes {dimension_semantics = [#tpu.dimension_semantics<parallel>, #tpu.dimension_semantics<arbitrary>], iteration_bounds = array<i64: 1, 1>, scalar_prefetch = 0 : i64, scratch_operands = 0 : i64, tpu.core_type = #tpu.core_type<tc>, window_params = [{transform_indices = @transform_0, window_bounds = array<i64: 8, 32>}, {transform_indices = @transform_1, window_bounds = array<i64: 8, 1>}, {transform_indices = @transform_2, window_bounds = array<i64: 1, 1, 1>}]} {
    %c0_i32 = arith.constant 0 : i32
    %0 = arith.cmpi eq, %arg1, %c0_i32 : i32
    %1 = arith.extui %0 : i1 to i32
    %c0_i32_0 = arith.constant 0 : i32
    %2 = arith.cmpi ne, %1, %c0_i32_0 : i32
    scf.if %2 {
      %cst_20 = arith.constant 0.000000e+00 : f32
      %52 = vector.broadcast %cst_20 : f32 to vector<1x1x1xf32>
      %c0_21 = arith.constant 0 : index
      %c0_22 = arith.constant 0 : index
      %c0_23 = arith.constant 0 : index
      %53 = vector.load %arg4[%c0_21, %c0_22, %c0_23] : memref<1x1x1xf32, #tpu.memory_space<vmem>>, vector<1x1x1xf32>
      tpu.vector_store %arg4[%c0_21, %c0_22, %c0_23], %52 {strides = array<i32>} : memref<1x1x1xf32, #tpu.memory_space<vmem>>, vector<1x1x1xf32>,
    } else {
    }
    %c0 = arith.constant 0 : index
    %c0_1 = arith.constant 0 : index
    %3 = vector.load %arg2[%c0, %c0_1] : memref<8x32xf32, #tpu.memory_space<vmem>>, vector<8x32xf32>
    %c0_2 = arith.constant 0 : index
    %c0_3 = arith.constant 0 : index
    %4 = vector.load %arg3[%c0_2, %c0_3] : memref<8x1xi32, #tpu.memory_space<vmem>>, vector<8x1xi32>
    %5 = tpu.iota {dimensions = array<i32: 1>} : vector<8x32xi32>
    %6 = vector.broadcast %4 : vector<8x1xi32> to vector<8x32xi32>
    %7 = arith.cmpi eq, %5, %6 : vector<8x32xi32>
    %c0_i32_4 = arith.constant 0 : i32
    %8 = arith.sitofp %c0_i32_4 : i32 to f32
    %9 = vector.broadcast %8 : f32 to vector<8x32xf32>
    %10 = arith.select %7, %3, %9 : vector<8x32xi1>, vector<8x32xf32>
    %cst = arith.constant dense<0.000000e+00> : vector<8xf32>
    %11 = vector.multi_reduction <add>, %10, %cst [1] : vector<8x32xf32> to vector<8xf32>
    %12 = vector.shape_cast %11 : vector<8xf32> to vector<8x1xf32>
    %cst_5 = arith.constant dense<0xFF800000> : vector<8xf32>
    %13 = vector.multi_reduction <maximumf>, %3, %cst_5 [1] : vector<8x32xf32> to vector<8xf32>
    %14 = vector.shape_cast %13 : vector<8xf32> to vector<8x1xf32>
    %15 = vector.broadcast %14 : vector<8x1xf32> to vector<8x32xf32>
    %16 = arith.subf %3, %15 : vector<8x32xf32>
    %17 = math.exp %16 : vector<8x32xf32>
    %cst_6 = arith.constant dense<0.000000e+00> : vector<8xf32>
    %18 = vector.multi_reduction <add>, %17, %cst_6 [1] : vector<8x32xf32> to vector<8xf32>
    %19 = vector.shape_cast %18 : vector<8xf32> to vector<8x1xf32>
    %20 = math.log %19 : vector<8x1xf32>
    %21 = arith.addf %14, %20 : vector<8x1xf32>
    %c1_i32 = arith.constant 1 : i32
    %22 = arith.muli %arg0, %c1_i32 : i32
    %23 = arith.addi %22, %arg1 : i32
    %c8_i32 = arith.constant 8 : i32
    %24 = arith.muli %23, %c8_i32 : i32
    %25 = tpu.iota {dimensions = array<i32: 0>} : vector<8x1xi32>
    %26 = vector.broadcast %24 : i32 to vector<8x1xi32>
    %27 = arith.addi %25, %26 : vector<8x1xi32>
    %c8_i32_7 = arith.constant 8 : i32
    %28 = vector.broadcast %c8_i32_7 : i32 to vector<8x1xi32>
    %29 = arith.cmpi slt, %27, %28 : vector<8x1xi32>
    %30 = arith.subf %21, %12 : vector<8x1xf32>
    %cst_8 = arith.constant 0.000000e+00 : f32
    %31 = vector.broadcast %cst_8 : f32 to vector<8x1xf32>
    %32 = arith.select %29, %30, %31 : vector<8x1xi1>, vector<8x1xf32>
    %cst_9 = arith.constant 0.000000e+00 : f32
    %33 = vector.broadcast %cst_9 : f32 to vector<8x1xf32>
    %34 = arith.subf %33, %32 : vector<8x1xf32>
    %35 = math.exp %34 : vector<8x1xf32>
    %cst_10 = arith.constant 1.000000e+00 : f32
    %36 = vector.broadcast %cst_10 : f32 to vector<8x1xf32>
    %37 = arith.subf %36, %35 : vector<8x1xf32>
    %cst_11 = arith.constant 0.000000e+00 : f32
    %38 = vector.broadcast %cst_11 : f32 to vector<8x1xf32>
    %39 = arith.maximumf %37, %38 : vector<8x1xf32>
    %40 = arith.mulf %39, %39 : vector<8x1xf32>
    %41 = arith.mulf %40, %32 : vector<8x1xf32>
    %cst_12 = arith.constant 0.000000e+00 : f32
    %42 = vector.broadcast %cst_12 : f32 to vector<8x1xf32>
    %43 = arith.select %29, %41, %42 : vector<8x1xi1>, vector<8x1xf32>
    %c0_13 = arith.constant 0 : index
    %c0_14 = arith.constant 0 : index
    %c0_15 = arith.constant 0 : index
    %44 = vector.load %arg4[%c0_13, %c0_14, %c0_15] : memref<1x1x1xf32, #tpu.memory_space<vmem>>, vector<1x1x1xf32>
    %45 = vector.shape_cast %43 : vector<8x1xf32> to vector<1x8x1xf32>
    %cst_16 = arith.constant dense<0.000000e+00> : vector<1xf32>
    %46 = vector.multi_reduction <add>, %45, %cst_16 [1, 2] : vector<1x8x1xf32> to vector<1xf32>
    %47 = vector.shape_cast %46 : vector<1xf32> to vector<1x1x1xf32>
    %48 = vector.extract %47[0, 0, 0] : f32 from vector<1x1x1xf32>
    %49 = vector.broadcast %48 : f32 to vector<1x1x1xf32>
    %50 = arith.addf %44, %49 : vector<1x1x1xf32>
    %c0_17 = arith.constant 0 : index
    %c0_18 = arith.constant 0 : index
    %c0_19 = arith.constant 0 : index
    %51 = vector.load %arg4[%c0_17, %c0_18, %c0_19] : memref<1x1x1xf32, #tpu.memory_space<vmem>>, vector<1x1x1xf32>
    tpu.vector_store %arg4[%c0_17, %c0_18, %c0_19], %50 {strides = array<i32>} : memref<1x1x1xf32, #tpu.memory_space<vmem>>, vector<1x1x1xf32>,
    return
  }
  func.func @transform_0(%arg0: i32, %arg1: i32) -> (i32, i32) {
    %c1_i32 = arith.constant 1 : i32
    %0 = arith.muli %arg0, %c1_i32 : i32
    %1 = arith.addi %0, %arg1 : i32
    %c0_i32 = arith.constant 0 : i32
    %2 = arith.minsi %1, %c0_i32 : i32
    %c0_i32_0 = arith.constant 0 : i32
    %c0_i32_1 = arith.constant 0 : i32
    return %2, %c0_i32_0 : i32, i32
  }
  func.func @transform_1(%arg0: i32, %arg1: i32) -> (i32, i32) {
    %c1_i32 = arith.constant 1 : i32
    %0 = arith.muli %arg0, %c1_i32 : i32
    %1 = arith.addi %0, %arg1 : i32
    %c0_i32 = arith.constant 0 : i32
    %2 = arith.minsi %1, %c0_i32 : i32
    %c0_i32_0 = arith.constant 0 : i32
    %c0_i32_1 = arith.constant 0 : i32
    return %2, %c0_i32_0 : i32, i32
  }
  func.func @transform_2(%arg0: i32, %arg1: i32) -> (i32, i32, i32) {
    %c0_i32 = arith.constant 0 : i32
    %c0_i32_0 = arith.constant 0 : i32
    %c0_i32_1 = arith.constant 0 : i32
    return %arg0, %c0_i32, %c0_i32_0 : i32, i32, i32
  }
}

</mosaic_0001>

<llo_original>
// kernel: tpu_custom_call.1
$region0: #{tpu_custom_call.1}
  #allocation0 [shape = 'u32[]', space=smem, size = 0x4, offset = 0x4, fixed_abs, tag = 'smem constant byte address 0x4 - core index']
  #allocation1 [shape = 'u32[144,128]{1,0:T(1,128)}', space=vmem, size = 0x12000, scoped, tag = 'internal scratch']
  %s0 = inlined_call_operand.vmem [shape: f32[8,32], index: 0, kind: input, shape index: {}]
  %s1 = inlined_call_operand.vmem [shape: s32[8,1], index: 1, kind: input, shape index: {}]
  %s2 = inlined_call_operand.hbm [shape: f32[1,1,1], index: 2, kind: output, shape index: {}]
  %s3 = sld [smem:[#allocation0]]
  $region22: #{tpu_custom_call.1} parent=0
    _
  %s5 = ssub.s32 1, %s3
  %s6 = scalar_select 0, %s5, %s3
  $region1: #{tpu_custom_call.1} parent=0
    #allocation2 [shape = 'u8[512]{0}', space=vmem, size = 0x400, scoped, tag = 'output window, operand 0, single buffered']
    #allocation3 [shape = 's32[1]{0}', space=sflag, size = 0x4, scoped, tag = 'scoped memory for tpu_custom_call.1']
    %7 = vsyncpa [#allocation3], 0
    // Predicated region
    $region2: #{tpu_custom_call.1} parent=1 // pred_check
      _
    $region3: #{tpu_custom_call.1} parent=1 // pred_check_branch
      %9 = sbr.rel (0) target = $region5
    $region4: #{tpu_custom_call.1} parent=1 // pred_region
      %s10 = sadd.s32 0, 0
      %p11 = scmp.lt.s32.totalorder %s10, 0
      %s12 = scalar_select %p11, %s10, 0
      %p13 = scmp.lt.s32.totalorder %s12, 0
      %s14 = scalar_select %p13, %s12, 0
      %s15 = smul.addr %s14, 8
      %s16 = scalar_lea.vmem %s0, %s15
      %s17 = sadd.s32 0, 0
      %p18 = scmp.lt.s32.totalorder %s17, 0
      %s19 = scalar_select %p18, %s17, 0
    $region5: #{tpu_custom_call.1} parent=1 // pred_fallthru
      _
    // Predicated region
    $region6: #{tpu_custom_call.1} parent=1 // pred_check
      _
    $region7: #{tpu_custom_call.1} parent=1 // pred_check_branch
      %21 = sbr.rel (0) target = $region9
    $region8: #{tpu_custom_call.1} parent=1 // pred_region
      %s22 = sadd.s32 0, 0
      %p23 = scmp.lt.s32.totalorder %s22, 0
      %s24 = scalar_select %p23, %s22, 0
      %p25 = scmp.lt.s32.totalorder %s24, 0
      %s26 = scalar_select %p25, %s24, 0
      %s27 = smul.addr %s26, 8
      %s28 = scalar_lea.vmem %s1, %s27
      %s29 = sadd.s32 0, 0
      %p30 = scmp.lt.s32.totalorder %s29, 0
      %s31 = scalar_select %p30, %s29, 0
    $region9: #{tpu_custom_call.1} parent=1 // pred_fallthru
      _
    %s32 = sadd.s32 0, 0
    %p33 = scmp.lt.s32.totalorder %s32, 0
    %s34 = scalar_select %p33, %s32, 0
    %p35 = scmp.lt.s32.totalorder %s34, 0
    %s36 = scalar_select %p35, %s34, 0
    %s37 = smul.addr %s36, 8
    %s38 = scalar_lea.vmem %s0, %s37
    %s39 = sadd.s32 0, 0
    %p40 = scmp.lt.s32.totalorder %s39, 0
    %s41 = scalar_select %p40, %s39, 0
    %p42 = scmp.lt.s32.totalorder %s41, 0
    %s43 = scalar_select %p42, %s41, 0
    %s44 = smul.addr %s43, 8
    %s45 = scalar_lea.vmem %s1, %s44
    %s46 = sadd.s32 0, 0
    %p47 = scmp.lt.s32.totalorder %s46, 0
    %s48 = scalar_select %p47, %s46, 0
    %p49 = scmp.lt.s32.totalorder %s48, 0
    %s50 = scalar_select %p49, %s48, 0
    %s51 = smul.addr %s50, 8
    %s52 = scalar_lea.vmem %s0, %s51
    %s53 = sadd.s32 0, 0
    %p54 = scmp.lt.s32.totalorder %s53, 0
    %s55 = scalar_select %p54, %s53, 0
    %s56 = sadd.s32 0, 0
    %p57 = scmp.lt.s32.totalorder %s56, 0
    %s58 = scalar_select %p57, %s56, 0
    %p59 = scmp.lt.s32.totalorder %s58, 0
    %s60 = scalar_select %p59, %s58, 0
    %s61 = smul.addr %s60, 8
    %s62 = scalar_lea.vmem %s1, %s61
    %s63 = sadd.s32 0, 0
    %p64 = scmp.lt.s32.totalorder %s63, 0
    %s65 = scalar_select %p64, %s63, 0
    %p66 = scmp.eq.s32.totalorder 0, 0
    // Predicated region
    $region10: #{tpu_custom_call.1} parent=1 // pred_check
      %p67 = pneg %p66
    $region11: #{tpu_custom_call.1} parent=1 // pred_check_branch
      %69 = sbr.rel (%p67) target = $region13
    $region12: #{tpu_custom_call.1} parent=1 // pred_region
      %vm70 = vcmask 0
      %71 = vst.msk [vmem:[#allocation2] sm:$0x1] %vm70, 0.0
    $region13: #{tpu_custom_call.1} parent=1 // pred_fallthru
      _
    %v72 = vld [vmem:[%s52] sm:$0xff]
    %v73 = vld [vmem:[%s62] sm:$0xff]
    %v74 = vlaneseq
    %v75 = vand.u32 %v74, 127
    %76 = vset.pattern.permute.xlu0 0
    %77 = vperm.xlu0 %76, %v73
    %v78 = vpop.permute.xlu0 %77
    %vm79 = vcmp.eq.s32.totalorder %v75, %v78
    %v80 = vsel %vm79, %v72, 0.0
    %vm81 = vcmask 261120
    %v82 = vsel %vm81, %v80, 0.0
    %83 = vadd.xlane.f32.xlu0 %v82
    %v84 = vpop.xlane.xlu0 %83
    %v85 = vsel %vm81, %v72, -inf
    %86 = vmax.xlane.f32.xlu0 %v85
    %v87 = vpop.xlane.xlu0 %86
    %v88 = vsub.f32 %v72, %v87
    %v89 = vmul.f32 %v88, 1.442695
    %v90 = vpow.pop %v89
    %v91 = vsel %vm81, %v90, 0.0
    %92 = vadd.xlane.f32.xlu0 %v91
    %v93 = vpop.xlane.xlu0 %92
    %v94 = vlog2.pop %v93
    %v95 = vmul.f32 %v94, 0.6931472
    %v96 = vadd.f32 %v87, %v95
    %s97 = sadd.s32 0, 0
    %s98 = smul.u32 %s97, 8
    %v99 = vlaneseq
    %v100 = vshrl.u32 %v99, 7
    %v101 = vstv %s98
    %v102 = vadd.s32 %v100, %v101
    %vm103 = vcmp.lt.s32.totalorder %v102, 8
    %v104 = vsub.f32 %v96, %v84
    %v105 = vsel %vm103, %v104, 0.0
    %v106 = vsub.f32 0.0, %v105
    %v107 = vmul.f32 %v106, 1.442695
    %v108 = vpow.pop %v107
    %v109 = vsub.f32 1.0, %v108
    %v110 = vmax.f32 %v109, 0.0
    %v111 = vmul.f32 %v110, %v110
    %v112 = vmul.f32 %v111, %v105
    %v113 = vsel %vm103, %v112, 0.0
    %v114 = vld [vmem:[#allocation2] sm:$0x1]
    %vm115 = vcmask 7168
    %v116 = vsel %vm115, %v113, 0.0
    %117 = vadd.xlane.f32.xlu0 %v116
    %v118 = vpop.xlane.xlu0 %117
    %v119 = vrot.slane %v118, 4
    %v120 = vadd.f32 %v118, %v119
    %v121 = vrot.slane %v120, 2
    %v122 = vadd.f32 %v120, %v121
    %v123 = vrot.slane %v122, 1
    %v124 = vadd.f32 %v122, %v123
    %s125 = vtos %v124
    %v126 = vstv %s125
    %v127 = vadd.f32 %v114, %v126
    %vm128 = vcmask 0
    %129 = vst.msk [vmem:[#allocation2] sm:$0x1] %vm128, %v127
    // Predicated region
    $region14: #{tpu_custom_call.1} parent=1 // pred_check
      _
    $region15: #{tpu_custom_call.1} parent=1 // pred_check_branch
      %131 = sbr.rel (0) target = $region17
    $region16: #{tpu_custom_call.1} parent=1 // pred_region
      %s133 = ssub.s32 16, 16
      %134 = vsyncadd [#allocation3], %s133
      %s136 = sshll.u32 [#allocation2], 4
      %s137 = int_to_ptr.vmem [resolvable:$true] %s136
      %139 = dma.vmem_to_hbm [thread:$0]  %s137, 16, %s2, [#allocation3]
    $region17: #{tpu_custom_call.1} parent=1 // pred_fallthru
      _
    // Predicated region
    $region18: #{tpu_custom_call.1} parent=1 // pred_check
      _
    $region19: #{tpu_custom_call.1} parent=1 // pred_check_branch
      %141 = sbr.rel (0) target = $region21
    $region20: #{tpu_custom_call.1} parent=1 // pred_region
      %142 = dma.done [#allocation3], 16
    $region21: #{tpu_custom_call.1} parent=1 // pred_fallthru
      _
    %143 = vsyncpa [#allocation3], 1

</llo_original>
